<compile_context>
chip_gen: v6e
topology: v6e:2x2x1
jax: 0.10.0
libtpu: 0.0.40
codegen_flags: <defaults>
</compile_context>

<pallas_src>
import functools

import jax
import jax.numpy as jnp
from jax.experimental import pallas as pl
from jax.experimental.pallas import tpu as pltpu

HIDDEN = 32
NEG_BIG = -1.0e30  # finite "-inf" sentinel (exp underflows to exactly 0.0)


def _round_up(x: int, m: int) -> int:
    return ((x + m - 1) // m) * m


def _mlp_kernel(x_ref, mask_ref, w1_ref, b1_ref, w2_ref, b2_ref, w3_ref,
                o_ref, *, apply_softmax: bool):
    # x arrives as f32 straight from HBM; bf16 cast is free VPU filler.
    x = x_ref[...].astype(jnp.bfloat16)                          # (TB, in)

    # fc1 + relu  (bf16 MXU inputs, f32 accumulation / elementwise)
    h1 = jnp.dot(x, w1_ref[...], preferred_element_type=jnp.float32)
    h1 = jnp.maximum(h1 + b1_ref[...], 0.0)                      # (TB, 32) f32

    # fc2 + relu
    h2 = jnp.dot(h1.astype(jnp.bfloat16), w2_ref[...],
                 preferred_element_type=jnp.float32)
    h2 = jnp.maximum(h2 + b2_ref[...], 0.0)                      # (TB, 32) f32

    # fc3; bias b3 and the additive legal mask are pre-folded into mask_ref.
    logits = jnp.dot(h2.astype(jnp.bfloat16), w3_ref[...],
                     preferred_element_type=jnp.float32)
    logits = logits + mask_ref[...]                              # (TB, OUT_W)

    if apply_softmax:
        m = jnp.max(logits, axis=-1, keepdims=True)
        e = jnp.exp(logits - m)                  # illegal / padded cols -> 0.0
        out = e / jnp.sum(e, axis=-1, keepdims=True)
    else:
        out = logits
    o_ref[...] = out.astype(o_ref.dtype)


def prepare_params(params, output_dims, *, pad_output=True):
    """One-time kernel-ready weight prep (bf16 casts, lane-padded fc3).

    Cache the result next to `params`; only the legal mask changes per call.
    """
    w1, b1, w2, b2, w3, b3 = params                # f32, (fan_in, fan_out)
    hidden = w1.shape[1]
    # Lane-dense 128-wide output slab (full-width vst) by default; narrow
    # (= output_dims) writeback moves fewer bytes and may win on v5e.
    out_w = _round_up(max(output_dims, 1), 128) if pad_output else output_dims

    w1_b = w1.astype(jnp.bfloat16)
    w2_b = w2.astype(jnp.bfloat16)
    w3_b = (jnp.zeros((hidden, out_w), jnp.float32)
            .at[:, :output_dims].set(w3).astype(jnp.bfloat16))
    b3_p = jnp.zeros((1, out_w), jnp.float32).at[:, :output_dims].set(b3)
    return (w1_b, b1, w2_b, b2, w3_b, b3_p, out_w)


def mlp_forward(x, legal_mask, prepped, output_dims, *, block_b=2048,
                out_dtype=jnp.bfloat16):
    """x: (B, input_dims) f32, legal_mask: (output_dims,) (0 = illegal)."""
    w1_b, b1, w2_b, b2, w3_b, b3_p, out_w = prepped
    B, input_dims = x.shape
    hidden = w1_b.shape[1]

    # Batch tile: large (amortize ~0.35us/step), multiple of 8.  Keep >= 2
    # grid steps when the batch is big enough so v7x's two TensorCores both
    # get work under dimension_semantics=("parallel",).
    tb = min(block_b, _round_up(max(B, 1), 8))
    if B > 8:
        tb = min(tb, _round_up(pl.cdiv(B, 2), 8))
    grid = (pl.cdiv(B, tb),)

    # Per-call prep: additive legal mask with b3 folded in (pad cols illegal).
    legal = jnp.reshape(legal_mask.astype(jnp.float32), (1, output_dims))
    add_mask = jnp.full((1, out_w), NEG_BIG, jnp.float32)
    add_mask = add_mask.at[:, :output_dims].set(
        jnp.where(legal == 0.0, jnp.float32(NEG_BIG), jnp.float32(0.0)))
    mask_b3 = add_mask + b3_p

    kernel = functools.partial(_mlp_kernel, apply_softmax=(output_dims > 1))
    const = lambda i: (0, 0)                       # resident weights / mask

    out = pl.pallas_call(
        kernel,
        out_shape=jax.ShapeDtypeStruct((B, out_w), out_dtype),
        grid=grid,
        in_specs=[
            pl.BlockSpec((tb, input_dims), lambda i: (i, 0)),    # x tile (f32)
            pl.BlockSpec((1, out_w), const),                     # mask + b3
            pl.BlockSpec((input_dims, hidden), const),           # w1
            pl.BlockSpec((1, hidden), const),                    # b1
            pl.BlockSpec((hidden, hidden), const),               # w2
            pl.BlockSpec((1, hidden), const),                    # b2
            pl.BlockSpec((hidden, out_w), const),                # w3 (padded)
        ],
        out_specs=pl.BlockSpec((tb, out_w), lambda i: (i, 0)),
        compiler_params=pltpu.CompilerParams(
            dimension_semantics=("parallel",),       # megacore on v7x
            vmem_limit_bytes=32 * 1024 * 1024),      # lift v5e's 16 MiB default
    )(x, mask_b3, w1_b, b1, w2_b, b2, w3_b)

    return out[:B, :output_dims].astype(jnp.float32)


def init_params(key, input_dims, output_dims):
    """Deterministic init mimicking nn.Linear (uniform +/- 1/sqrt(fan_in)).

    Weights are (fan_in, fan_out) — transpose of PyTorch storage — so the
    kernel can do x @ W directly.
    """
    ks = jax.random.split(key, 6)

    def linear(kw, kb, fan_in, fan_out):
        bound = 1.0 / jnp.sqrt(jnp.float32(fan_in))
        w = jax.random.uniform(kw, (fan_in, fan_out), jnp.float32,
                               minval=-bound, maxval=bound)
        b = jax.random.uniform(kb, (1, fan_out), jnp.float32,
                               minval=-bound, maxval=bound)
        return w, b

    w1, b1 = linear(ks[0], ks[1], input_dims, HIDDEN)
    w2, b2 = linear(ks[2], ks[3], HIDDEN, HIDDEN)
    w3, b3 = linear(ks[4], ks[5], HIDDEN, output_dims)
    return (w1, b1, w2, b2, w3, b3)


if __name__ == "__main__":
    input_dims = 16
    output_dims = 8
    batch = 2

    key = jax.random.PRNGKey(0)
    k_x, k_m, k_p = jax.random.split(key, 3)

    x = jax.random.normal(k_x, (batch, input_dims), jnp.float32)
    # 0/1 legal-move mask over actions (shared across batch, as in the module);
    # ensure at least one legal move.
    legal = (jax.random.uniform(k_m, (output_dims,)) > 0.5).astype(jnp.float32)
    legal = legal.at[0].set(1.0)

    params = init_params(k_p, input_dims, output_dims)
    prepped = prepare_params(params, output_dims)      # cached once per model

    out = jax.block_until_ready(mlp_forward(x, legal, prepped, output_dims))

    # Pure-JAX f32 reference of the module's forward pass.
    w1, b1, w2, b2, w3, b3 = params
    h1 = jnp.maximum(x @ w1 + b1, 0.0)
    h2 = jnp.maximum(h1 @ w2 + b2, 0.0)
    logits = h2 @ w3 + b3 + jnp.where(legal[None, :] == 0.0, -jnp.inf, 0.0)
    ref = jax.nn.softmax(logits, axis=-1)

    # Sanity: shape, finiteness, probability rows, illegal moves exactly 0,
    # and agreement with the f32 reference (bf16 matmuls + bf16 output).
    assert out.shape == (batch, output_dims)
    assert bool(jnp.all(jnp.isfinite(out)))
    assert bool(jnp.allclose(jnp.sum(out, axis=-1), 1.0, atol=1e-2))
    assert bool(jnp.all(jnp.where(legal[None, :] == 0.0, out, 0.0) == 0.0))
    assert bool(jnp.allclose(out, ref, atol=5e-2))

    print("KERNEL_OK")
</pallas_src>

<mosaic_0001>
module attributes {stable_mosaic.version = 11 : i64} {
  func.func @_mlp_kernel(%arg0: i32, %arg1: memref<8x16xf32, #tpu.memory_space<vmem>>, %arg2: memref<1x128xf32, #tpu.memory_space<vmem>>, %arg3: memref<16x32xbf16, #tpu.memory_space<vmem>>, %arg4: memref<1x32xf32, #tpu.memory_space<vmem>>, %arg5: memref<32x32xbf16, #tpu.memory_space<vmem>>, %arg6: memref<1x32xf32, #tpu.memory_space<vmem>>, %arg7: memref<32x128xbf16, #tpu.memory_space<vmem>>, %arg8: memref<8x128xbf16, #tpu.memory_space<vmem>>) attributes {dimension_semantics = [#tpu.dimension_semantics<parallel>], iteration_bounds = array<i64: 1>, scalar_prefetch = 0 : i64, scratch_operands = 0 : i64, tpu.core_type = #tpu.core_type<tc>, window_params = [{transform_indices = @transform_0, window_bounds = array<i64: 8, 16>}, {pipeline_mode = #tpu.pipeline_mode<synchronous>, transform_indices = @transform_1, window_bounds = array<i64: 1, 128>}, {pipeline_mode = #tpu.pipeline_mode<synchronous>, transform_indices = @transform_2, window_bounds = array<i64: 16, 32>}, {pipeline_mode = #tpu.pipeline_mode<synchronous>, transform_indices = @transform_3, window_bounds = array<i64: 1, 32>}, {pipeline_mode = #tpu.pipeline_mode<synchronous>, transform_indices = @transform_4, window_bounds = array<i64: 32, 32>}, {pipeline_mode = #tpu.pipeline_mode<synchronous>, transform_indices = @transform_5, window_bounds = array<i64: 1, 32>}, {pipeline_mode = #tpu.pipeline_mode<synchronous>, transform_indices = @transform_6, window_bounds = array<i64: 32, 128>}, {transform_indices = @transform_7, window_bounds = array<i64: 8, 128>}]} {
    %c0 = arith.constant 0 : index
    %c0_0 = arith.constant 0 : index
    %0 = vector.load %arg1[%c0, %c0_0] : memref<8x16xf32, #tpu.memory_space<vmem>>, vector<8x16xf32>
    %1 = arith.truncf %0 : vector<8x16xf32> to vector<8x16xbf16>
    %c0_1 = arith.constant 0 : index
    %c0_2 = arith.constant 0 : index
    %2 = vector.load %arg3[%c0_1, %c0_2] : memref<16x32xbf16, #tpu.memory_space<vmem>>, vector<16x32xbf16>
    %cst = arith.constant dense<0.000000e+00> : vector<8x32xf32>
    %3 = tpu.matmul %1, %2, %cst {dimension_numbers = #tpu.dot_dimension_numbers<[1], [0], [0], [1], [0, 0, 1, 1], [], []>} : vector<8x16xbf16>, vector<16x32xbf16>, vector<8x32xf32> -> vector<8x32xf32>
    %c0_3 = arith.constant 0 : index
    %c0_4 = arith.constant 0 : index
    %4 = vector.load %arg4[%c0_3, %c0_4] : memref<1x32xf32, #tpu.memory_space<vmem>>, vector<1x32xf32>
    %5 = vector.broadcast %4 : vector<1x32xf32> to vector<8x32xf32>
    %6 = arith.addf %3, %5 : vector<8x32xf32>
    %cst_5 = arith.constant 0.000000e+00 : f32
    %7 = vector.broadcast %cst_5 : f32 to vector<8x32xf32>
    %8 = arith.maximumf %6, %7 : vector<8x32xf32>
    %9 = arith.truncf %8 : vector<8x32xf32> to vector<8x32xbf16>
    %c0_6 = arith.constant 0 : index
    %c0_7 = arith.constant 0 : index
    %10 = vector.load %arg5[%c0_6, %c0_7] : memref<32x32xbf16, #tpu.memory_space<vmem>>, vector<32x32xbf16>
    %cst_8 = arith.constant dense<0.000000e+00> : vector<8x32xf32>
    %11 = tpu.matmul %9, %10, %cst_8 {dimension_numbers = #tpu.dot_dimension_numbers<[1], [0], [0], [1], [0, 0, 1, 1], [], []>} : vector<8x32xbf16>, vector<32x32xbf16>, vector<8x32xf32> -> vector<8x32xf32>
    %c0_9 = arith.constant 0 : index
    %c0_10 = arith.constant 0 : index
    %12 = vector.load %arg6[%c0_9, %c0_10] : memref<1x32xf32, #tpu.memory_space<vmem>>, vector<1x32xf32>
    %13 = vector.broadcast %12 : vector<1x32xf32> to vector<8x32xf32>
    %14 = arith.addf %11, %13 : vector<8x32xf32>
    %cst_11 = arith.constant 0.000000e+00 : f32
    %15 = vector.broadcast %cst_11 : f32 to vector<8x32xf32>
    %16 = arith.maximumf %14, %15 : vector<8x32xf32>
    %17 = arith.truncf %16 : vector<8x32xf32> to vector<8x32xbf16>
    %c0_12 = arith.constant 0 : index
    %c0_13 = arith.constant 0 : index
    %18 = vector.load %arg7[%c0_12, %c0_13] : memref<32x128xbf16, #tpu.memory_space<vmem>>, vector<32x128xbf16>
    %cst_14 = arith.constant dense<0.000000e+00> : vector<8x128xf32>
    %19 = tpu.matmul %17, %18, %cst_14 {dimension_numbers = #tpu.dot_dimension_numbers<[1], [0], [0], [1], [0, 0, 1, 1], [], []>} : vector<8x32xbf16>, vector<32x128xbf16>, vector<8x128xf32> -> vector<8x128xf32>
    %c0_15 = arith.constant 0 : index
    %c0_16 = arith.constant 0 : index
    %20 = vector.load %arg2[%c0_15, %c0_16] : memref<1x128xf32, #tpu.memory_space<vmem>>, vector<1x128xf32>
    %21 = vector.broadcast %20 : vector<1x128xf32> to vector<8x128xf32>
    %22 = arith.addf %19, %21 : vector<8x128xf32>
    %cst_17 = arith.constant dense<0xFF800000> : vector<8xf32>
    %23 = vector.multi_reduction <maximumf>, %22, %cst_17 [1] : vector<8x128xf32> to vector<8xf32>
    %24 = vector.shape_cast %23 : vector<8xf32> to vector<8x1xf32>
    %25 = vector.broadcast %24 : vector<8x1xf32> to vector<8x128xf32>
    %26 = arith.subf %22, %25 : vector<8x128xf32>
    %27 = math.exp %26 : vector<8x128xf32>
    %cst_18 = arith.constant dense<0.000000e+00> : vector<8xf32>
    %28 = vector.multi_reduction <add>, %27, %cst_18 [1] : vector<8x128xf32> to vector<8xf32>
    %29 = vector.shape_cast %28 : vector<8xf32> to vector<8x1xf32>
    %30 = vector.broadcast %29 : vector<8x1xf32> to vector<8x128xf32>
    %31 = arith.divf %27, %30 : vector<8x128xf32>
    %32 = arith.truncf %31 : vector<8x128xf32> to vector<8x128xbf16>
    %c0_19 = arith.constant 0 : index
    %c0_20 = arith.constant 0 : index
    %33 = vector.load %arg8[%c0_19, %c0_20] : memref<8x128xbf16, #tpu.memory_space<vmem>>, vector<8x128xbf16>
    tpu.vector_store %arg8[%c0_19, %c0_20], %32 {strides = array<i32>} : memref<8x128xbf16, #tpu.memory_space<vmem>>, vector<8x128xbf16>,
    return
  }
  func.func @transform_0(%arg0: i32) -> (i32, i32) {
    %c0_i32 = arith.constant 0 : i32
    %c0_i32_0 = arith.constant 0 : i32
    return %arg0, %c0_i32 : i32, i32
  }
  func.func @transform_1(%arg0: i32) -> (i32, i32) {
    %c0_i32 = arith.constant 0 : i32
    %c0_i32_0 = arith.constant 0 : i32
    %c0_i32_1 = arith.constant 0 : i32
    return %c0_i32, %c0_i32_0 : i32, i32
  }
  func.func @transform_2(%arg0: i32) -> (i32, i32) {
    %c0_i32 = arith.constant 0 : i32
    %c0_i32_0 = arith.constant 0 : i32
    %c0_i32_1 = arith.constant 0 : i32
    return %c0_i32, %c0_i32_0 : i32, i32
  }
  func.func @transform_3(%arg0: i32) -> (i32, i32) {
    %c0_i32 = arith.constant 0 : i32
    %c0_i32_0 = arith.constant 0 : i32
    %c0_i32_1 = arith.constant 0 : i32
    return %c0_i32, %c0_i32_0 : i32, i32
  }
  func.func @transform_4(%arg0: i32) -> (i32, i32) {
    %c0_i32 = arith.constant 0 : i32
    %c0_i32_0 = arith.constant 0 : i32
    %c0_i32_1 = arith.constant 0 : i32
    return %c0_i32, %c0_i32_0 : i32, i32
  }
  func.func @transform_5(%arg0: i32) -> (i32, i32) {
    %c0_i32 = arith.constant 0 : i32
    %c0_i32_0 = arith.constant 0 : i32
    %c0_i32_1 = arith.constant 0 : i32
    return %c0_i32, %c0_i32_0 : i32, i32
  }
  func.func @transform_6(%arg0: i32) -> (i32, i32) {
    %c0_i32 = arith.constant 0 : i32
    %c0_i32_0 = arith.constant 0 : i32
    %c0_i32_1 = arith.constant 0 : i32
    return %c0_i32, %c0_i32_0 : i32, i32
  }
  func.func @transform_7(%arg0: i32) -> (i32, i32) {
    %c0_i32 = arith.constant 0 : i32
    %c0_i32_0 = arith.constant 0 : i32
    return %arg0, %c0_i32 : i32, i32
  }
}

</mosaic_0001>

<llo_original>
// kernel: tpu_custom_call.1
$region0: #{tpu_custom_call.1}
  #allocation0 [shape = 'u32[]', space=smem, size = 0x4, offset = 0x4, fixed_abs, tag = 'smem constant byte address 0x4 - core index']
  #allocation1 [shape = 'u32[144,128]{1,0:T(1,128)}', space=vmem, size = 0x12000, scoped, tag = 'internal scratch']
  %s0 = inlined_call_operand.hbm [shape: f32[2,16], index: 0, kind: input, shape index: {}]
  %s1 = inlined_call_operand.vmem [shape: f32[1,128], index: 1, kind: input, shape index: {}]
  %s2 = inlined_call_operand.hbm [shape: bf16[16,32], index: 2, kind: input, shape index: {}]
  %s3 = inlined_call_operand.vmem [shape: f32[1,32], index: 3, kind: input, shape index: {}]
  %s4 = inlined_call_operand.hbm [shape: bf16[32,32], index: 4, kind: input, shape index: {}]
  %s5 = inlined_call_operand.vmem [shape: f32[1,32], index: 5, kind: input, shape index: {}]
  %s6 = inlined_call_operand.hbm [shape: bf16[32,128], index: 6, kind: input, shape index: {}]
  %s7 = inlined_call_operand.hbm [shape: bf16[2,128], index: 7, kind: output, shape index: {}]
  %s8 = sld [smem:[#allocation0]]
  $region54: #{tpu_custom_call.1} parent=0
    _
  %s10 = ssub.s32 1, %s8
  %s11 = scalar_select 0, %s10, %s8
  $region1: #{tpu_custom_call.1} parent=0
    #allocation2 [shape = 'u8[4096]{0}', space=vmem, size = 0x1000, scoped, tag = 'input window, operand 0, single buffered']
    #allocation3 [shape = 's32[1]{0}', space=sflag, size = 0x4, scoped, tag = 'scoped memory for tpu_custom_call.1']
    #allocation4 [shape = 's32[1]{0}', space=sflag, size = 0x4, scoped, tag = 'scoped memory for tpu_custom_call.1']
    #allocation5 [shape = 'u8[4096]{0}', space=vmem, size = 0x1000, scoped, tag = 'input window, operand 2, single buffered']
    #allocation6 [shape = 's32[1]{0}', space=sflag, size = 0x4, scoped, tag = 'scoped memory for tpu_custom_call.1']
    #allocation7 [shape = 'u8[8192]{0}', space=vmem, size = 0x2000, scoped, tag = 'input window, operand 4, single buffered']
    #allocation8 [shape = 'u8[8192]{0}', space=vmem, size = 0x2000, scoped, tag = 'input window, operand 6, single buffered']
    #allocation9 [shape = 's32[1]{0}', space=sflag, size = 0x4, scoped, tag = 'scoped memory for tpu_custom_call.1']
    #allocation10 [shape = 'u8[2048]{0}', space=vmem, size = 0x800, scoped, tag = 'output window, operand 0, single buffered']
    %12 = vsyncpa [#allocation3], 0
    %13 = vsyncpa [#allocation6], 0
    %14 = vsyncpa [#allocation9], 0
    %15 = vsyncpa [#allocation4], 0
    // Predicated region
    $region2: #{tpu_custom_call.1} parent=1 // pred_check
      _
    $region3: #{tpu_custom_call.1} parent=1 // pred_check_branch
      %17 = sbr.rel (0) target = $region5
    $region4: #{tpu_custom_call.1} parent=1 // pred_region
      %s19 = ssub.s32 128, 32
      %20 = vsyncadd [#allocation3], %s19
      %s21 = sshll.u32 [#allocation2], 4
      %s22 = int_to_ptr.vmem [resolvable:$true] %s21
      %27 = dma.hbm_to_vmem [thread:$0]  %s0, 32, %s22, [#allocation3], 32, 32, 2
    $region5: #{tpu_custom_call.1} parent=1 // pred_fallthru
      _
    // Predicated region
    $region6: #{tpu_custom_call.1} parent=1 // pred_check
      _
    $region7: #{tpu_custom_call.1} parent=1 // pred_check_branch
      %29 = sbr.rel (0) target = $region9
    $region8: #{tpu_custom_call.1} parent=1 // pred_region
      _
    $region9: #{tpu_custom_call.1} parent=1 // pred_fallthru
      _
    // Predicated region
    $region10: #{tpu_custom_call.1} parent=1 // pred_check
      _
    $region11: #{tpu_custom_call.1} parent=1 // pred_check_branch
      %31 = sbr.rel (0) target = $region13
    $region12: #{tpu_custom_call.1} parent=1 // pred_region
      %s33 = ssub.s32 128, 128
      %34 = vsyncadd [#allocation6], %s33
      %s35 = sshll.u32 [#allocation5], 4
      %s36 = int_to_ptr.vmem [resolvable:$true] %s35
      %41 = dma.hbm_to_vmem [thread:$0]  %s2, 128, %s36, [#allocation6], 64, 64, 4
    $region13: #{tpu_custom_call.1} parent=1 // pred_fallthru
      _
    // Predicated region
    $region14: #{tpu_custom_call.1} parent=1 // pred_check
      _
    $region15: #{tpu_custom_call.1} parent=1 // pred_check_branch
      %43 = sbr.rel (0) target = $region17
    $region16: #{tpu_custom_call.1} parent=1 // pred_region
      _
    $region17: #{tpu_custom_call.1} parent=1 // pred_fallthru
      _
    // Predicated region
    $region18: #{tpu_custom_call.1} parent=1 // pred_check
      _
    $region19: #{tpu_custom_call.1} parent=1 // pred_check_branch
      %45 = sbr.rel (0) target = $region21
    $region20: #{tpu_custom_call.1} parent=1 // pred_region
      %s47 = ssub.s32 256, 256
      %48 = vsyncadd [#allocation6], %s47
      %s49 = sshll.u32 [#allocation7], 4
      %s50 = int_to_ptr.vmem [resolvable:$true] %s49
      %55 = dma.hbm_to_vmem [thread:$0]  %s4, 256, %s50, [#allocation6], 64, 64, 4
    $region21: #{tpu_custom_call.1} parent=1 // pred_fallthru
      _
    // Predicated region
    $region22: #{tpu_custom_call.1} parent=1 // pred_check
      _
    $region23: #{tpu_custom_call.1} parent=1 // pred_check_branch
      %57 = sbr.rel (0) target = $region25
    $region24: #{tpu_custom_call.1} parent=1 // pred_region
      _
    $region25: #{tpu_custom_call.1} parent=1 // pred_fallthru
      _
    // Predicated region
    $region26: #{tpu_custom_call.1} parent=1 // pred_check
      _
    $region27: #{tpu_custom_call.1} parent=1 // pred_check_branch
      %59 = sbr.rel (0) target = $region29
    $region28: #{tpu_custom_call.1} parent=1 // pred_region
      %s61 = ssub.s32 256, 256
      %62 = vsyncadd [#allocation9], %s61
      %s63 = sshll.u32 [#allocation8], 4
      %s64 = int_to_ptr.vmem [resolvable:$true] %s63
      %69 = dma.hbm_to_vmem [thread:$0]  %s6, 256, %s64, [#allocation9], 64, 64, 4
    $region29: #{tpu_custom_call.1} parent=1 // pred_fallthru
      _
    // Predicated region
    $region30: #{tpu_custom_call.1} parent=1 // pred_check
      _
    $region31: #{tpu_custom_call.1} parent=1 // pred_check_branch
      %71 = sbr.rel (0) target = $region33
    $region32: #{tpu_custom_call.1} parent=1 // pred_region
      %72 = dma.done [#allocation3], 128
    $region33: #{tpu_custom_call.1} parent=1 // pred_fallthru
      _
    // Predicated region
    $region34: #{tpu_custom_call.1} parent=1 // pred_check
      _
    $region35: #{tpu_custom_call.1} parent=1 // pred_check_branch
      %74 = sbr.rel (0) target = $region37
    $region36: #{tpu_custom_call.1} parent=1 // pred_region
      %75 = dma.done [#allocation6], 128
    $region37: #{tpu_custom_call.1} parent=1 // pred_fallthru
      _
    // Predicated region
    $region38: #{tpu_custom_call.1} parent=1 // pred_check
      _
    $region39: #{tpu_custom_call.1} parent=1 // pred_check_branch
      %77 = sbr.rel (0) target = $region41
    $region40: #{tpu_custom_call.1} parent=1 // pred_region
      %78 = dma.done [#allocation6], 256
    $region41: #{tpu_custom_call.1} parent=1 // pred_fallthru
      _
    // Predicated region
    $region42: #{tpu_custom_call.1} parent=1 // pred_check
      _
    $region43: #{tpu_custom_call.1} parent=1 // pred_check_branch
      %80 = sbr.rel (0) target = $region45
    $region44: #{tpu_custom_call.1} parent=1 // pred_region
      %81 = dma.done [#allocation9], 256
    $region45: #{tpu_custom_call.1} parent=1 // pred_fallthru
      _
    %v83 = vld [vmem:[#allocation2] sm:$0xff]
    %v84 = vpack.c.bf16 %v83, %v83
    %v85 = vld [vmem:[#allocation5] sm:$0xf]
    %v86 = vld [vmem:[#allocation5 + $0x4] sm:$0xf]
    %v87 = vld [vmem:[%s3] sm:$0x1]
    %v89 = vlaneseq
    %v90 = vshrl.u32 %v89, 7
    %v91 = vsub.s32 0, %v90
    %v92 = vrot.slane %v87, %v91
    %v96 = vunpack.c.l.b16 %v85
    %v97 = vunpack.c.l.b16 %v86
    %v98 = vpack.c.b16 %v97, %v96
    %vm100 = vcmask 130048
    %v102 = vsel %vm100, %v84, 0
    %104 = vmatprep.subr.bf16.mxu0 0
    %105 = vmatpush1.bf16.msra.mxu0 0
    %106 = vmatprep.subr.bf16.mxu0 0
    %107 = vmatpush1.bf16.msra.mxu0 0
    %108 = vmatprep.subr.bf16.mxu0 0
    %109 = vmatpush1.bf16.msra.mxu0 0
    %110 = vmatprep.subr.bf16.mxu0 0
    %111 = vmatpush1.bf16.msra.mxu0 0
    %112 = vmatprep.subr.bf16.mxu0 0
    %113 = vmatpush1.bf16.msra.mxu0 0
    %114 = vmatprep.subr.bf16.mxu0 0
    %115 = vmatpush1.bf16.msra.mxu0 0
    %116 = vmatprep.subr.bf16.mxu0 0
    %117 = vmatpush1.bf16.msra.mxu0 0
    %118 = vmatprep.subr.bf16.mxu0 0
    %119 = vmatpush1.bf16.msra.mxu0 %v98
    %120 = vmatprep.subr.bf16.mxu0 0
    %121 = vmatpush2.bf16.msra.mxu0 0
    %122 = vmatprep.subr.bf16.mxu0 0
    %123 = vmatpush2.bf16.msra.mxu0 0
    %124 = vmatprep.subr.bf16.mxu0 0
    %125 = vmatpush2.bf16.msra.mxu0 0
    %126 = vmatprep.subr.bf16.mxu0 0
    %127 = vmatpush2.bf16.msra.mxu0 0
    %128 = vmatprep.subr.bf16.mxu0 0
    %129 = vmatpush2.bf16.msra.mxu0 0
    %130 = vmatprep.subr.bf16.mxu0 0
    %131 = vmatpush2.bf16.msra.mxu0 0
    %132 = vmatprep.subr.bf16.mxu0 0
    %133 = vmatpush2.bf16.msra.mxu0 0
    %134 = vmatprep.subr.bf16.mxu0 0
    %135 = vmatpush2.bf16.msra.mxu0 0
    %136 = vmatprep.mubr.bf16.mxu0 0
    %137 = vmatmul.mubr.bf16.gmra.mxu0 %v102
    %v138 = vpop.f32.mrf.mxu0
    %v139 = vadd.f32 %v92, %v138
    %v140 = vpop.f32.mrf.mxu0
    %v141 = vpop.f32.mrf.mxu0
    %v142 = vpop.f32.mrf.mxu0
    %143 = vdwg.mxu0
    %v144 = vmax.f32 %v139, 0.0
    %v145 = vpack.c.bf16 %v144, %v144
    %v146 = vld [vmem:[#allocation7] sm:$0xf]
    %v147 = vld [vmem:[#allocation7 + $0x4] sm:$0xf]
    %v148 = vld [vmem:[#allocation7 + $0x8] sm:$0xf]
    %v149 = vld [vmem:[#allocation7 + $0xc] sm:$0xf]
    %v150 = vld [vmem:[%s5] sm:$0x1]
    %v152 = vlaneseq
    %v153 = vshrl.u32 %v152, 7
    %v154 = vsub.s32 0, %v153
    %v155 = vrot.slane %v150, %v154
    %v161 = vunpack.c.l.b16 %v146
    %v162 = vunpack.c.l.b16 %v147
    %v163 = vunpack.c.l.b16 %v148
    %v164 = vunpack.c.l.b16 %v149
    %v165 = vpack.c.b16 %v162, %v161
    %v166 = vpack.c.b16 %v164, %v163
    %vm169 = vcmask 261120
    %v171 = vsel %vm169, %v145, 0
    %173 = vmatprep.subr.bf16.mxu0 0
    %174 = vmatpush1.bf16.msra.mxu0 0
    %175 = vmatprep.subr.bf16.mxu0 0
    %176 = vmatpush1.bf16.msra.mxu0 0
    %177 = vmatprep.subr.bf16.mxu0 0
    %178 = vmatpush1.bf16.msra.mxu0 0
    %179 = vmatprep.subr.bf16.mxu0 0
    %180 = vmatpush1.bf16.msra.mxu0 0
    %181 = vmatprep.subr.bf16.mxu0 0
    %182 = vmatpush1.bf16.msra.mxu0 0
    %183 = vmatprep.subr.bf16.mxu0 0
    %184 = vmatpush1.bf16.msra.mxu0 0
    %185 = vmatprep.subr.bf16.mxu0 0
    %186 = vmatpush1.bf16.msra.mxu0 %v166
    %187 = vmatprep.subr.bf16.mxu0 0
    %188 = vmatpush1.bf16.msra.mxu0 %v165
    %189 = vmatprep.subr.bf16.mxu0 0
    %190 = vmatpush2.bf16.msra.mxu0 0
    %191 = vmatprep.subr.bf16.mxu0 0
    %192 = vmatpush2.bf16.msra.mxu0 0
    %193 = vmatprep.subr.bf16.mxu0 0
    %194 = vmatpush2.bf16.msra.mxu0 0
    %195 = vmatprep.subr.bf16.mxu0 0
    %196 = vmatpush2.bf16.msra.mxu0 0
    %197 = vmatprep.subr.bf16.mxu0 0
    %198 = vmatpush2.bf16.msra.mxu0 0
    %199 = vmatprep.subr.bf16.mxu0 0
    %200 = vmatpush2.bf16.msra.mxu0 0
    %201 = vmatprep.subr.bf16.mxu0 0
    %202 = vmatpush2.bf16.msra.mxu0 0
    %203 = vmatprep.subr.bf16.mxu0 0
    %204 = vmatpush2.bf16.msra.mxu0 0
    %205 = vmatprep.mubr.bf16.mxu0 0
    %206 = vmatmul.mubr.bf16.gmra.mxu0 %v171
    %v207 = vpop.f32.mrf.mxu0
    %v208 = vadd.f32 %v155, %v207
    %v209 = vpop.f32.mrf.mxu0
    %v210 = vpop.f32.mrf.mxu0
    %v211 = vpop.f32.mrf.mxu0
    %212 = vdwg.mxu0
    %v213 = vmax.f32 %v208, 0.0
    %v214 = vpack.c.bf16 %v213, %v213
    %v215 = vld [vmem:[#allocation8] sm:$0xf]
    %v216 = vld [vmem:[#allocation8 + $0x4] sm:$0xf]
    %v217 = vld [vmem:[#allocation8 + $0x8] sm:$0xf]
    %v218 = vld [vmem:[#allocation8 + $0xc] sm:$0xf]
    %v219 = vld [vmem:[%s1] sm:$0x1]
    %v221 = vlaneseq
    %v222 = vshrl.u32 %v221, 7
    %v223 = vsub.s32 0, %v222
    %v224 = vrot.slane %v219, %v223
    %v230 = vunpack.c.l.b16 %v215
    %v231 = vunpack.c.l.b16 %v216
    %v232 = vunpack.c.l.b16 %v217
    %v233 = vunpack.c.l.b16 %v218
    %v234 = vpack.c.b16 %v231, %v230
    %v235 = vpack.c.b16 %v233, %v232
    %v239 = vsel %vm169, %v214, 0
    %241 = vmatprep.subr.bf16.mxu0 0
    %242 = vmatpush1.bf16.msra.mxu0 0
    %243 = vmatprep.subr.bf16.mxu0 0
    %244 = vmatpush1.bf16.msra.mxu0 0
    %245 = vmatprep.subr.bf16.mxu0 0
    %246 = vmatpush1.bf16.msra.mxu0 0
    %247 = vmatprep.subr.bf16.mxu0 0
    %248 = vmatpush1.bf16.msra.mxu0 0
    %249 = vmatprep.subr.bf16.mxu0 0
    %250 = vmatpush1.bf16.msra.mxu0 0
    %251 = vmatprep.subr.bf16.mxu0 0
    %252 = vmatpush1.bf16.msra.mxu0 0
    %253 = vmatprep.subr.bf16.mxu0 0
    %254 = vmatpush1.bf16.msra.mxu0 %v235
    %255 = vmatprep.subr.bf16.mxu0 0
    %256 = vmatpush1.bf16.msra.mxu0 %v234
    %257 = vmatprep.subr.bf16.mxu0 0
    %258 = vmatpush2.bf16.msra.mxu0 0
    %259 = vmatprep.subr.bf16.mxu0 0
    %260 = vmatpush2.bf16.msra.mxu0 0
    %261 = vmatprep.subr.bf16.mxu0 0
    %262 = vmatpush2.bf16.msra.mxu0 0
    %263 = vmatprep.subr.bf16.mxu0 0
    %264 = vmatpush2.bf16.msra.mxu0 0
    %265 = vmatprep.subr.bf16.mxu0 0
    %266 = vmatpush2.bf16.msra.mxu0 0
    %267 = vmatprep.subr.bf16.mxu0 0
    %268 = vmatpush2.bf16.msra.mxu0 0
    %269 = vmatprep.subr.bf16.mxu0 0
    %270 = vmatpush2.bf16.msra.mxu0 0
    %271 = vmatprep.subr.bf16.mxu0 0
    %272 = vmatpush2.bf16.msra.mxu0 0
    %273 = vmatprep.mubr.bf16.mxu0 0
    %274 = vmatmul.mubr.bf16.gmra.mxu0 %v239
    %v275 = vpop.f32.mrf.mxu0
    %v276 = vadd.f32 %v224, %v275
    %v277 = vpop.f32.mrf.mxu0
    %v278 = vpop.f32.mrf.mxu0
    %v279 = vpop.f32.mrf.mxu0
    %280 = vdwg.mxu0
    %281 = vmax.xlane.f32.xlu0 %v276
    %v282 = vpop.xlane.xlu0 %281
    %v283 = vsub.f32 %v276, %v282
    %v284 = vmul.f32 %v283, 1.442695
    %v285 = vpow.pop %v284
    %286 = vadd.xlane.f32.xlu0 %v285
    %v287 = vpop.xlane.xlu0 %286
    %v288 = vrcp.pop %v287
    %v289 = vmul.f32 %v285, %v288
    %v290 = vpack.c.bf16 %v289, %v289
    %v293 = vunpack.c.l.s4 1966171168
    %v294 = vunpack.c.0.s8 %v293
    %v295 = vlaneseq
    %v296 = vshrl.u32 %v295, 7
    %v297 = vsub.s32 %v294, %v296
    %v298 = vrot.slane %v290, %v297
    %v299 = vcombine.high %v298, %v298
    %v301 = vunpack.c.l.s4 1966171168
    %v302 = vunpack.c.0.s8 %v301
    %v303 = vlaneseq
    %v304 = vshrl.u32 %v303, 7
    %v305 = vsub.s32 %v302, %v304
    %v306 = vrot.slane %v298, %v305
    %v308 = vunpack.c.l.s4 1966171168
    %v309 = vunpack.c.0.s8 %v308
    %v310 = vlaneseq
    %v311 = vshrl.u32 %v310, 7
    %v312 = vsub.s32 %v309, %v311
    %v313 = vrot.slane %v299, %v312
    %v314 = vcombine.high %v306, %v306
    %v315 = vcombine.high %v313, %v313
    %320 = vst [vmem:[#allocation10] sm:$0x1] %v306
    %321 = vst [vmem:[#allocation10 + $0x1] sm:$0x1] %v313
    %322 = vst [vmem:[#allocation10 + $0x2] sm:$0x1] %v314
    %323 = vst [vmem:[#allocation10 + $0x3] sm:$0x1] %v315
    // Predicated region
    $region46: #{tpu_custom_call.1} parent=1 // pred_check
      _
    $region47: #{tpu_custom_call.1} parent=1 // pred_check_branch
      %325 = sbr.rel (0) target = $region49
    $region48: #{tpu_custom_call.1} parent=1 // pred_region
      %s327 = ssub.s32 64, 16
      %328 = vsyncadd [#allocation4], %s327
      %s329 = sshll.u32 [#allocation10], 4
      %s330 = int_to_ptr.vmem [resolvable:$true] %s329
      %335 = dma.vmem_to_hbm [thread:$0]  %s330, 16, %s7, [#allocation4], 16, 16, 1
    $region49: #{tpu_custom_call.1} parent=1 // pred_fallthru
      _
    // Predicated region
    $region50: #{tpu_custom_call.1} parent=1 // pred_check
      _
    $region51: #{tpu_custom_call.1} parent=1 // pred_check_branch
      %337 = sbr.rel (0) target = $region53
    $region52: #{tpu_custom_call.1} parent=1 // pred_region
      %338 = dma.done [#allocation4], 64
    $region53: #{tpu_custom_call.1} parent=1 // pred_fallthru
      _
    %339 = vsyncpa [#allocation3], 1
    %340 = vsyncpa [#allocation6], 1
    %341 = vsyncpa [#allocation9], 1
    %342 = vsyncpa [#allocation4], 1

</llo_original>
